<compile_context>
chip_gen: v7x
topology: tpu7x:2x2x1
jax: 0.10.0
libtpu: 0.0.40
codegen_flags: <defaults>
</compile_context>

<pallas_src>
import functools

import jax
import jax.numpy as jnp
import numpy as np
from jax.experimental import pallas as pl
from jax.experimental.pallas import tpu as pltpu

LANE = 128                              # TPU lane width (last-dim granularity)
_TARGET_BLOCK_BYTES = 2 * 1024 * 1024   # cap: 2 in + 2 out buffers ~ 8 MiB VMEM
_MIN_BLOCK_BYTES = 128 * 1024           # floor so tiny tensors use one block


def _cdiv(a, b):
    return -(-a // b)


def _sublane_pack(dtype):
    """Rows filling full vregs for this dtype: 8 (32b) / 16 (16b) / 32 (8b)."""
    return {4: 8, 2: 16, 1: 32}.get(jnp.dtype(dtype).itemsize, 8)


def _block_budget(total_bytes):
    """Per-block byte budget: big blocks, but >=4 grid steps for mid tensors."""
    return min(_TARGET_BLOCK_BYTES, max(_MIN_BLOCK_BYTES, _cdiv(total_bytes, 4)))


def _elementwise_kernel(x_ref, o_ref, *, fn):
    # Load the VMEM tile, apply the element-wise func, store it back.  For a
    # ragged final block the out-of-bounds part of o_ref is never written back
    # to HBM (Pallas edge masking), so fn(garbage) in the tail is harmless.
    o_ref[...] = fn(x_ref[...]).astype(o_ref.dtype)


def _apply_packed_2d(x, fn, out_dtype, donate_input):
    """Lane-dense path: total elements is a multiple of 128 — reshape only,
    no padding.  Ragged grid rows handled by Pallas edge-block masking."""
    shape = x.shape
    total = int(x.size)
    in_dt, out_dt = jnp.dtype(x.dtype), jnp.dtype(out_dtype)
    itemsize = max(in_dt.itemsize, out_dt.itemsize)
    sub = max(_sublane_pack(in_dt), _sublane_pack(out_dt))

    # Widest lane-dense column count that exactly divides total while leaving
    # at least one full sublane pack of rows.  128 always divides total here.
    cols = LANE
    for c in (2048, 1024, 512, 256):
        if total % c == 0 and total // c >= sub:
            cols = c
            break
    rows = total // cols

    budget = _block_budget(total * itemsize)
    block_rows = max(sub, (budget // (cols * itemsize)) // sub * sub)
    block_rows = min(block_rows, _cdiv(rows, sub) * sub)

    x2d = x.reshape(rows, cols)                      # no pad, no slice
    grid = (_cdiv(rows, block_rows),)                # last block edge-masked

    out2d = pl.pallas_call(
        functools.partial(_elementwise_kernel, fn=fn),
        out_shape=jax.ShapeDtypeStruct((rows, cols), out_dt),
        grid_spec=pltpu.PrefetchScalarGridSpec(
            num_scalar_prefetch=0,
            grid=grid,
            in_specs=[pl.BlockSpec((block_rows, cols), lambda i: (i, 0))],
            out_specs=pl.BlockSpec((block_rows, cols), lambda i: (i, 0)),
        ),
        compiler_params=pltpu.CompilerParams(
            dimension_semantics=("parallel",),       # shards over both v7x TCs
        ),
        cost_estimate=pl.CostEstimate(
            flops=total, transcendentals=0,
            bytes_accessed=total * (in_dt.itemsize + out_dt.itemsize)),
        input_output_aliases=(
            {0: 0} if (donate_input and in_dt == out_dt) else {}),
    )(x2d)
    return out2d.reshape(shape)


def _apply_nd(x, fn, out_dtype, donate_input):
    """Natural-shape path for totals not divisible by 128: no pad, no repack.
    Streams (bl, bh, bw) blocks whose last two dims either equal the full
    array dims or are (8,128)-aligned; ragged extents use edge masking."""
    shape = x.shape
    total = int(x.size)
    in_dt, out_dt = jnp.dtype(x.dtype), jnp.dtype(out_dtype)
    itemsize = max(in_dt.itemsize, out_dt.itemsize)

    if x.ndim >= 2:
        H, W = shape[-2], shape[-1]
        L = int(np.prod(shape[:-2]))
    else:
        L, H, W = 1, 1, total
    x3 = x.reshape(L, H, W)                          # leading-dim collapse only

    budget = _block_budget(total * itemsize)
    face = H * W * itemsize
    if face <= budget:
        # Whole (H, W) face per block (last two dims == full dims -> legal),
        # batch several leading entries per block.
        bl, bh, bw = max(1, min(L, budget // face)), H, W
    elif W * itemsize * 8 <= budget:
        # Tile the second-to-last dim by multiples of 8, full-width rows.
        bl = 1
        bh = min((budget // (W * itemsize)) // 8 * 8, _cdiv(H, 8) * 8)
        bw = W
    else:
        # Very long last dim: tile it by multiples of 128 as well.
        bl = 1
        bh = 8 if H >= 8 else H
        bw = min((budget // (bh * itemsize)) // LANE * LANE,
                 _cdiv(W, LANE) * LANE)

    grid = (_cdiv(L, bl), _cdiv(H, bh), _cdiv(W, bw))

    out3 = pl.pallas_call(
        functools.partial(_elementwise_kernel, fn=fn),
        out_shape=jax.ShapeDtypeStruct((L, H, W), out_dt),
        grid_spec=pltpu.PrefetchScalarGridSpec(
            num_scalar_prefetch=0,
            grid=grid,
            in_specs=[pl.BlockSpec((bl, bh, bw), lambda l, h, w: (l, h, w))],
            out_specs=pl.BlockSpec((bl, bh, bw), lambda l, h, w: (l, h, w)),
        ),
        compiler_params=pltpu.CompilerParams(
            dimension_semantics=("parallel", "parallel", "parallel"),
        ),
        cost_estimate=pl.CostEstimate(
            flops=total, transcendentals=0,
            bytes_accessed=total * (in_dt.itemsize + out_dt.itemsize)),
        input_output_aliases=(
            {0: 0} if (donate_input and in_dt == out_dt) else {}),
    )(x3)
    return out3.reshape(shape)


def pallas_apply_elementwise(x, fn, *, donate_input=False):
    """Apply a shape-preserving element-wise `fn` via a Pallas streaming kernel.

    No wrapper-side padding or slicing: ragged extents are handled by Pallas
    edge-block masking inside the pallas_call.  When `donate_input=True` and
    `fn` preserves dtype, the output aliases the (reshaped) input buffer — the
    caller must not reuse `x` afterwards.
    """
    x = jnp.asarray(x)
    if x.ndim == 0 or x.size == 0:
        return fn(x)
    out_aval = jax.eval_shape(fn, jax.ShapeDtypeStruct(x.shape, x.dtype))
    if out_aval.shape != x.shape:
        # Not element-wise (e.g. a view/reshape) — bypass Pallas entirely.
        return fn(x)
    out_dtype = out_aval.dtype
    if x.size % LANE == 0:
        return _apply_packed_2d(x, fn, out_dtype, donate_input)
    return _apply_nd(x, fn, out_dtype, donate_input)


class Lambda:
    """JAX/Pallas equivalent of the PyTorch Lambda module.

    __init__ stores `func`; __call__ (forward) returns func(x).  No parameters.
    """

    def __init__(self, func):
        self.func = func

    def __call__(self, x):
        return self.func(x)


def mnist_flatten(x):
    """Equivalent of `lambda x: x.view(x.size(0), -1)` — metadata-only, no kernel."""
    return x.reshape(x.shape[0], -1)


if __name__ == "__main__":
    key = jax.random.PRNGKey(0)
    N, C, H, W = 2, 4, 16, 16
    x = jax.random.normal(key, (N, C, H, W), dtype=jnp.float32)
    xnp = np.asarray(x)

    # 1) Lambda(view) — pure reshape, Pallas bypassed.
    flatten = Lambda(mnist_flatten)
    flat = jax.block_until_ready(flatten(x))
    assert flat.shape == (N, C * H * W) and flat.dtype == jnp.float32
    np.testing.assert_array_equal(np.asarray(flat), xnp.reshape(N, -1))

    # 2) Element-wise Lambda, total % 128 == 0 -> lane-dense packed path.
    ew = Lambda(lambda v: pallas_apply_elementwise(
        v, lambda t: jnp.maximum(t, 0.0) * 2.0))
    y = jax.block_until_ready(ew(x))
    np.testing.assert_allclose(np.asarray(y), np.maximum(xnp, 0.0) * 2.0,
                               rtol=1e-6, atol=1e-6)
    assert y.shape == x.shape and y.dtype == x.dtype

    # 3) Canonical MNIST shape: total = 1568, NOT a multiple of 128 —
    #    natural-shape path, zero wrapper padding / slicing.
    xm = jax.random.normal(jax.random.PRNGKey(1), (2, 1, 28, 28), jnp.float32)
    ym = jax.block_until_ready(pallas_apply_elementwise(xm, lambda t: t + 1.0))
    np.testing.assert_allclose(np.asarray(ym), np.asarray(xm) + 1.0,
                               rtol=1e-6, atol=1e-6)

    # 4) Packed path with a ragged final block (rows=25, block_rows=16):
    #    exercises in-kernel edge masking instead of pad/slice.
    xe = jax.random.normal(jax.random.PRNGKey(2), (2, 100, 256), jnp.float32)
    ye = jax.block_until_ready(pallas_apply_elementwise(
        xe, lambda t: t * 0.5 + 1.0))
    np.testing.assert_allclose(np.asarray(ye), np.asarray(xe) * 0.5 + 1.0,
                               rtol=1e-6, atol=1e-6)

    # 5) dtype-changing fn (f32 -> bf16): output dtype derived via eval_shape.
    yb = jax.block_until_ready(pallas_apply_elementwise(
        x, lambda t: (t * 2.0).astype(jnp.bfloat16)))
    refb = np.asarray((jnp.asarray(xnp) * 2.0).astype(jnp.bfloat16),
                      dtype=np.float32)
    assert yb.dtype == jnp.bfloat16
    np.testing.assert_allclose(np.asarray(yb, dtype=np.float32), refb,
                               rtol=1e-2, atol=1e-2)

    # 6) Natural-shape path with ragged leading-dim blocks (L=5, bl=3) and a
    #    2-D ragged case (H tiled by 8s, non-dividing) — both edge-masked.
    xr = jax.random.normal(jax.random.PRNGKey(3), (5, 109, 100), jnp.float32)
    yr = jax.block_until_ready(pallas_apply_elementwise(xr, lambda t: t - 3.0))
    np.testing.assert_allclose(np.asarray(yr), np.asarray(xr) - 3.0,
                               rtol=1e-6, atol=1e-6)
    x2 = jax.random.normal(jax.random.PRNGKey(4), (300, 113), jnp.float32)
    y2 = jax.block_until_ready(pallas_apply_elementwise(x2, jnp.abs))
    np.testing.assert_allclose(np.asarray(y2), np.abs(np.asarray(x2)),
                               rtol=1e-6, atol=1e-6)

    print("KERNEL_OK")
</pallas_src>

<mosaic_0001>
module attributes {stable_mosaic.version = 11 : i64} {
  func.func @_elementwise_kernel(%arg0: i32, %arg1: memref<8x256xf32, #tpu.memory_space<vmem>>, %arg2: memref<8x256xf32, #tpu.memory_space<vmem>>) attributes {dimension_semantics = [#tpu.dimension_semantics<parallel>], iteration_bounds = array<i64: 1>, scalar_prefetch = 0 : i64, scratch_operands = 0 : i64, tpu.core_type = #tpu.core_type<tc>, window_params = [{transform_indices = @transform_0, window_bounds = array<i64: 8, 256>}, {transform_indices = @transform_1, window_bounds = array<i64: 8, 256>}]} {
    %c0 = arith.constant 0 : index
    %c0_0 = arith.constant 0 : index
    %0 = vector.load %arg1[%c0, %c0_0] : memref<8x256xf32, #tpu.memory_space<vmem>>, vector<8x256xf32>
    %cst = arith.constant 0.000000e+00 : f32
    %1 = vector.broadcast %cst : f32 to vector<8x256xf32>
    %2 = arith.maximumf %0, %1 : vector<8x256xf32>
    %cst_1 = arith.constant 2.000000e+00 : f32
    %3 = vector.broadcast %cst_1 : f32 to vector<8x256xf32>
    %4 = arith.mulf %2, %3 : vector<8x256xf32>
    %c0_2 = arith.constant 0 : index
    %c0_3 = arith.constant 0 : index
    %5 = vector.load %arg2[%c0_2, %c0_3] : memref<8x256xf32, #tpu.memory_space<vmem>>, vector<8x256xf32>
    tpu.vector_store %arg2[%c0_2, %c0_3], %4 {strides = array<i32>} : memref<8x256xf32, #tpu.memory_space<vmem>>, vector<8x256xf32>,
    return
  }
  func.func @transform_0(%arg0: i32) -> (i32, i32) {
    %c0_i32 = arith.constant 0 : i32
    %c0_i32_0 = arith.constant 0 : i32
    return %arg0, %c0_i32 : i32, i32
  }
  func.func @transform_1(%arg0: i32) -> (i32, i32) {
    %c0_i32 = arith.constant 0 : i32
    %c0_i32_0 = arith.constant 0 : i32
    return %arg0, %c0_i32 : i32, i32
  }
}

</mosaic_0001>

<llo_original>
// kernel: tpu_custom_call.1
$region0: #{tpu_custom_call.1}
  #allocation0 [shape = 'u32[]', space=smem, size = 0x4, offset = 0x4, fixed_abs, tag = 'smem constant byte address 0x4 - core index']
  #allocation1 [shape = 'u32[144,128]{1,0:T(1,128)}', space=vmem, size = 0x12000, scoped, tag = 'internal scratch']
  %s0 = inlined_call_operand.hbm [shape: f32[8,256], index: 0, kind: input, shape index: {}]
  %s1 = inlined_call_operand.hbm [shape: f32[8,256], index: 1, kind: output, shape index: {}]
  %s2 = sld [smem:[#allocation0]]
  $region18: #{tpu_custom_call.1} parent=0
    _
  %s4 = ssub.s32 1, %s2
  %s5 = scalar_select 0, %s4, %s2
  $region1: #{tpu_custom_call.1} parent=0
    #allocation2 [shape = 'u8[8192]{0}', space=vmem, size = 0x2000, scoped, tag = 'input window, operand 0, single buffered']
    #allocation3 [shape = 's32[1]{0}', space=sflag, size = 0x4, scoped, tag = 'scoped memory for tpu_custom_call.1']
    #allocation4 [shape = 's32[1]{0}', space=sflag, size = 0x4, scoped, tag = 'scoped memory for tpu_custom_call.1']
    #allocation5 [shape = 'u8[8192]{0}', space=vmem, size = 0x2000, scoped, tag = 'output window, operand 0, single buffered']
    %6 = vsyncpa [#allocation3], 0
    %7 = vsyncpa [#allocation4], 0
    // Predicated region
    $region2: #{tpu_custom_call.1} parent=1 // pred_check
      _
    $region3: #{tpu_custom_call.1} parent=1 // pred_check_branch
      %9 = sbr.rel (0) target = $region5
    $region4: #{tpu_custom_call.1} parent=1 // pred_region
      %s11 = ssub.s32 256, 256
      %12 = vsyncadd [#allocation3], %s11
      %s14 = sshll.u32 [#allocation2], 4
      %s15 = int_to_ptr.vmem [resolvable:$true] %s14
      %17 = dma.hbm_to_vmem [thread:$0]  %s0, 256, %s15, [#allocation3]
    $region5: #{tpu_custom_call.1} parent=1 // pred_fallthru
      _
    // Predicated region
    $region6: #{tpu_custom_call.1} parent=1 // pred_check
      _
    $region7: #{tpu_custom_call.1} parent=1 // pred_check_branch
      %19 = sbr.rel (0) target = $region9
    $region8: #{tpu_custom_call.1} parent=1 // pred_region
      %20 = dma.done [#allocation3], 256
    $region9: #{tpu_custom_call.1} parent=1 // pred_fallthru
      _
    %v21 = vld [vmem:[#allocation2] sm:$0xff]
    %v22 = vld [vmem:[#allocation2 + $0x8] sm:$0xff]
    %v23 = vmax.f32 %v21, 0.0
    %v24 = vmax.f32 %v22, 0.0
    %v25 = vmul.f32 %v23, 2.0
    %v26 = vmul.f32 %v24, 2.0
    %27 = vst [vmem:[#allocation5] sm:$0xff] %v25
    %28 = vst [vmem:[#allocation5 + $0x8] sm:$0xff] %v26
    // Predicated region
    $region10: #{tpu_custom_call.1} parent=1 // pred_check
      _
    $region11: #{tpu_custom_call.1} parent=1 // pred_check_branch
      %30 = sbr.rel (0) target = $region13
    $region12: #{tpu_custom_call.1} parent=1 // pred_region
      %s32 = ssub.s32 256, 256
      %33 = vsyncadd [#allocation4], %s32
      %s35 = sshll.u32 [#allocation5], 4
      %s36 = int_to_ptr.vmem [resolvable:$true] %s35
      %38 = dma.vmem_to_hbm [thread:$0]  %s36, 256, %s1, [#allocation4]
    $region13: #{tpu_custom_call.1} parent=1 // pred_fallthru
      _
    // Predicated region
    $region14: #{tpu_custom_call.1} parent=1 // pred_check
      _
    $region15: #{tpu_custom_call.1} parent=1 // pred_check_branch
      %40 = sbr.rel (0) target = $region17
    $region16: #{tpu_custom_call.1} parent=1 // pred_region
      %41 = dma.done [#allocation4], 256
    $region17: #{tpu_custom_call.1} parent=1 // pred_fallthru
      _
    %42 = vsyncpa [#allocation3], 1
    %43 = vsyncpa [#allocation4], 1

</llo_original>
